<compile_context>
chip_gen: v5e
topology: v5e:2x2
jax: 0.10.0
libtpu: 0.0.40
codegen_flags: <defaults>
</compile_context>

<pallas_src>
import jax
import jax.numpy as jnp
from jax.experimental import pallas as pl
from jax.experimental.pallas import tpu as pltpu


def _se_kernel(x_ref, w1_ref, b1_ref, w2_ref, b2_ref, o_ref):
    """One (nb, C, HW) NCHW block: pool -> FC -> Swish -> FC -> Sigmoid -> gate."""
    # Squeeze: global average pool over HW (lane axis), f32 accumulation, no
    # materialized full-tile f32 copy.
    pooled = jnp.mean(x_ref[...], axis=2, dtype=jnp.float32)        # (nb, C)

    # 1x1 conv #1 (C -> R) + Swish. Params arrive pre-transposed & in f32.
    h = jnp.dot(pooled, w1_ref[...],
                preferred_element_type=jnp.float32,
                precision=jax.lax.Precision.HIGHEST) + b1_ref[...]  # (nb, R)
    h = h * jax.nn.sigmoid(h)

    # 1x1 conv #2 (R -> C) + Sigmoid -> per-channel gate.
    s = jax.nn.sigmoid(jnp.dot(h, w2_ref[...],
                               preferred_element_type=jnp.float32,
                               precision=jax.lax.Precision.HIGHEST)
                       + b2_ref[...])                               # (nb, C)

    # Excite in the native I/O dtype; gate broadcasts over the HW lane axis.
    gate = s.astype(o_ref.dtype)[:, :, None]                        # (nb, C, 1)
    o_ref[...] = x_ref[...] * gate


def _vmem_capacity_bytes():
    """Physical VMEM per core; conservative (v7x) fallback if query fails."""
    try:
        cap = getattr(pltpu.get_tpu_info(), "vmem_capacity_bytes", None)
        if cap:
            return int(cap)
    except Exception:
        pass
    return 64 << 20


def _pick_batch_block(n, per_item_bytes, max_tile_bytes):
    """Fixed batch block; grid is cdiv-based so nb need not divide n."""
    if per_item_bytes >= max_tile_bytes:
        # TODO(synk): for huge single-image tiles, split HW with a partial-sum
        # pool (2-pass / 'arbitrary' finalize axis) instead of one giant block.
        return 1
    nb = max(1, int(max_tile_bytes // per_item_bytes))
    nb = min(nb, n)
    # Keep >= 2 grid steps on the "parallel" batch axis whenever N allows:
    # v7x has 2 TensorCores sharing the grid; a 1-step grid idles one TC.
    if nb >= n and n > 1:
        nb = (n + 1) // 2
    return nb


def squeeze_excitation(x, w1, b1, w2, b2):
    """x: (N, C, H, W); w1: (R, C); b1: (R,); w2: (C, R); b2: (C,).

    Matches: x * sigmoid(conv1x1(swish(conv1x1(avgpool(x))))).
    """
    N, C, H, W = x.shape
    R = w1.shape[0]
    HW = H * W

    # NCHW, flattened spatial; no HBM relayout (reshape of contiguous data).
    x3 = x.reshape(N, C, HW)
    itemsize = x3.dtype.itemsize

    vmem_cap = _vmem_capacity_bytes()
    # ~8 MiB tiles on 64 MiB-VMEM chips (v7x), ~16 MiB on 128 MiB chips.
    max_tile_bytes = (8 << 20) if vmem_cap <= (64 << 20) else (16 << 20)

    nb = _pick_batch_block(N, C * HW * itemsize, max_tile_bytes)
    grid = (pl.cdiv(N, nb),)

    # Params: pre-transpose once, cast to compute dtype once (trace time).
    w1t = w1.T.astype(jnp.float32)          # (C, R)
    w2t = w2.T.astype(jnp.float32)          # (R, C)
    b1_2d = b1.reshape(1, R).astype(jnp.float32)
    b2_2d = b2.reshape(1, C).astype(jnp.float32)

    block = (nb, C, HW)
    x_spec = pl.BlockSpec(block, lambda i: (i, 0, 0))
    o_spec = pl.BlockSpec(block, lambda i: (i, 0, 0))

    # VMEM budget: double-buffered in+out blocks + params + small intermediates
    # (pooled/gate are tiny, and there is no full-tile f32 copy anymore).
    tile_bytes = nb * C * HW * itemsize
    param_bytes = (w1t.size + w2t.size + b1_2d.size + b2_2d.size) * 4
    need = 4 * tile_bytes + 2 * param_bytes + (2 << 20)
    vmem_limit = int(min(max(need, 32 << 20), int(vmem_cap * 0.8)))

    out = pl.pallas_call(
        _se_kernel,
        out_shape=jax.ShapeDtypeStruct(x3.shape, x.dtype),
        grid_spec=pltpu.PrefetchScalarGridSpec(
            num_scalar_prefetch=0,
            grid=grid,
            in_specs=[
                x_spec,
                pl.BlockSpec((C, R), lambda i: (0, 0)),
                pl.BlockSpec((1, R), lambda i: (0, 0)),
                pl.BlockSpec((R, C), lambda i: (0, 0)),
                pl.BlockSpec((1, C), lambda i: (0, 0)),
            ],
            out_specs=o_spec,
        ),
        compiler_params=pltpu.CompilerParams(
            dimension_semantics=("parallel",),
            vmem_limit_bytes=vmem_limit,
        ),
    )(x3, w1t, b1_2d, w2t, b2_2d)

    return out.reshape(N, C, H, W)


def _reference(x, w1, b1, w2, b2):
    pooled = jnp.mean(x, axis=(2, 3))                                       # (N, C)
    h = jnp.dot(pooled, w1.T, precision=jax.lax.Precision.HIGHEST) + b1     # (N, R)
    h = h * jax.nn.sigmoid(h)
    s = jax.nn.sigmoid(jnp.dot(h, w2.T, precision=jax.lax.Precision.HIGHEST) + b2)
    return x * s[:, :, None, None]


if __name__ == "__main__":
    key = jax.random.PRNGKey(0)

    # Test 1: small shape matching SqueezeExcitation(in_planes=4, reduced_dim=2).
    N, C, H, W, R = 2, 4, 16, 16, 2
    kx, k1, k2, k3, k4, key = jax.random.split(key, 6)
    x = jax.random.normal(kx, (N, C, H, W), dtype=jnp.float32)
    w1 = jax.random.normal(k1, (R, C), dtype=jnp.float32) * 0.5
    b1 = jax.random.normal(k2, (R,), dtype=jnp.float32) * 0.1
    w2 = jax.random.normal(k3, (C, R), dtype=jnp.float32) * 0.5
    b2 = jax.random.normal(k4, (C,), dtype=jnp.float32) * 0.1
    out = squeeze_excitation(x, w1, b1, w2, b2)
    jax.block_until_ready(out)
    ref = _reference(x, w1, b1, w2, b2)
    assert jnp.allclose(out, ref, atol=2e-5, rtol=2e-5), "mismatch (small shape)"

    # Test 2: late-EfficientNet-style shape (C=128, HW=49), NCHW end-to-end
    # (no wrapper relayout; trailing ragged-free 2-step parallel grid).
    N, C, H, W, R = 4, 128, 7, 7, 32
    kx, k1, k2, k3, k4, key = jax.random.split(key, 6)
    x = jax.random.normal(kx, (N, C, H, W), dtype=jnp.float32)
    w1 = jax.random.normal(k1, (R, C), dtype=jnp.float32) * 0.15
    b1 = jax.random.normal(k2, (R,), dtype=jnp.float32) * 0.1
    w2 = jax.random.normal(k3, (C, R), dtype=jnp.float32) * 0.15
    b2 = jax.random.normal(k4, (C,), dtype=jnp.float32) * 0.1
    out = squeeze_excitation(x, w1, b1, w2, b2)
    jax.block_until_ready(out)
    ref = _reference(x, w1, b1, w2, b2)
    assert jnp.allclose(out, ref, atol=2e-5, rtol=2e-5), "mismatch (late-stage shape)"

    # Test 3: odd batch size exercising the cdiv / ragged trailing block path.
    N, C, H, W, R = 3, 8, 16, 16, 4
    kx, k1, k2, k3, k4, key = jax.random.split(key, 6)
    x = jax.random.normal(kx, (N, C, H, W), dtype=jnp.float32)
    w1 = jax.random.normal(k1, (R, C), dtype=jnp.float32) * 0.3
    b1 = jax.random.normal(k2, (R,), dtype=jnp.float32) * 0.1
    w2 = jax.random.normal(k3, (C, R), dtype=jnp.float32) * 0.3
    b2 = jax.random.normal(k4, (C,), dtype=jnp.float32) * 0.1
    out = squeeze_excitation(x, w1, b1, w2, b2)
    jax.block_until_ready(out)
    ref = _reference(x, w1, b1, w2, b2)
    assert jnp.allclose(out, ref, atol=2e-5, rtol=2e-5), "mismatch (ragged batch)"

    print("KERNEL_OK")
</pallas_src>

<mosaic_0001>
module attributes {stable_mosaic.version = 11 : i64} {
  func.func @_se_kernel(%arg0: i32, %arg1: memref<1x4x256xf32, #tpu.memory_space<vmem>>, %arg2: memref<4x2xf32, #tpu.memory_space<vmem>>, %arg3: memref<1x2xf32, #tpu.memory_space<vmem>>, %arg4: memref<2x4xf32, #tpu.memory_space<vmem>>, %arg5: memref<1x4xf32, #tpu.memory_space<vmem>>, %arg6: memref<1x4x256xf32, #tpu.memory_space<vmem>>) attributes {dimension_semantics = [#tpu.dimension_semantics<parallel>], iteration_bounds = array<i64: 2>, scalar_prefetch = 0 : i64, scratch_operands = 0 : i64, tpu.core_type = #tpu.core_type<tc>, window_params = [{transform_indices = @transform_0, window_bounds = array<i64: 1, 4, 256>}, {pipeline_mode = #tpu.pipeline_mode<synchronous>, transform_indices = @transform_1, window_bounds = array<i64: 4, 2>}, {pipeline_mode = #tpu.pipeline_mode<synchronous>, transform_indices = @transform_2, window_bounds = array<i64: 1, 2>}, {pipeline_mode = #tpu.pipeline_mode<synchronous>, transform_indices = @transform_3, window_bounds = array<i64: 2, 4>}, {pipeline_mode = #tpu.pipeline_mode<synchronous>, transform_indices = @transform_4, window_bounds = array<i64: 1, 4>}, {transform_indices = @transform_5, window_bounds = array<i64: 1, 4, 256>}]} {
    %c0 = arith.constant 0 : index
    %c0_0 = arith.constant 0 : index
    %c0_1 = arith.constant 0 : index
    %0 = vector.load %arg1[%c0, %c0_0, %c0_1] : memref<1x4x256xf32, #tpu.memory_space<vmem>>, vector<1x4x256xf32>
    %cst = arith.constant dense<0.000000e+00> : vector<1x4xf32>
    %1 = vector.multi_reduction <add>, %0, %cst [2] : vector<1x4x256xf32> to vector<1x4xf32>
    %cst_2 = arith.constant 2.560000e+02 : f32
    %2 = vector.broadcast %cst_2 : f32 to vector<1x4xf32>
    %3 = arith.divf %1, %2 : vector<1x4xf32>
    %c0_3 = arith.constant 0 : index
    %c0_4 = arith.constant 0 : index
    %4 = vector.load %arg2[%c0_3, %c0_4] : memref<4x2xf32, #tpu.memory_space<vmem>>, vector<4x2xf32>
    %cst_5 = arith.constant dense<0.000000e+00> : vector<1x2xf32>
    %5 = tpu.matmul %3, %4, %cst_5 {dimension_numbers = #tpu.dot_dimension_numbers<[1], [0], [0], [1], [0, 0, 1, 1], [], []>, precision = #tpu.contract_precision<fp32>} : vector<1x4xf32>, vector<4x2xf32>, vector<1x2xf32> -> vector<1x2xf32>
    %c0_6 = arith.constant 0 : index
    %c0_7 = arith.constant 0 : index
    %6 = vector.load %arg3[%c0_6, %c0_7] : memref<1x2xf32, #tpu.memory_space<vmem>>, vector<1x2xf32>
    %7 = arith.addf %5, %6 : vector<1x2xf32>
    %8 = arith.negf %7 : vector<1x2xf32>
    %9 = math.exp %8 : vector<1x2xf32>
    %cst_8 = arith.constant 1.000000e+00 : f32
    %10 = vector.broadcast %cst_8 : f32 to vector<1x2xf32>
    %11 = arith.addf %10, %9 : vector<1x2xf32>
    %12 = arith.divf %10, %11 : vector<1x2xf32>
    %13 = arith.mulf %7, %12 : vector<1x2xf32>
    %c0_9 = arith.constant 0 : index
    %c0_10 = arith.constant 0 : index
    %14 = vector.load %arg4[%c0_9, %c0_10] : memref<2x4xf32, #tpu.memory_space<vmem>>, vector<2x4xf32>
    %cst_11 = arith.constant dense<0.000000e+00> : vector<1x4xf32>
    %15 = tpu.matmul %13, %14, %cst_11 {dimension_numbers = #tpu.dot_dimension_numbers<[1], [0], [0], [1], [0, 0, 1, 1], [], []>, precision = #tpu.contract_precision<fp32>} : vector<1x2xf32>, vector<2x4xf32>, vector<1x4xf32> -> vector<1x4xf32>
    %c0_12 = arith.constant 0 : index
    %c0_13 = arith.constant 0 : index
    %16 = vector.load %arg5[%c0_12, %c0_13] : memref<1x4xf32, #tpu.memory_space<vmem>>, vector<1x4xf32>
    %17 = arith.addf %15, %16 : vector<1x4xf32>
    %18 = arith.negf %17 : vector<1x4xf32>
    %19 = math.exp %18 : vector<1x4xf32>
    %cst_14 = arith.constant 1.000000e+00 : f32
    %20 = vector.broadcast %cst_14 : f32 to vector<1x4xf32>
    %21 = arith.addf %20, %19 : vector<1x4xf32>
    %22 = arith.divf %20, %21 : vector<1x4xf32>
    %23 = vector.shape_cast %22 : vector<1x4xf32> to vector<1x4x1xf32>
    %c0_15 = arith.constant 0 : index
    %c0_16 = arith.constant 0 : index
    %c0_17 = arith.constant 0 : index
    %24 = vector.load %arg1[%c0_15, %c0_16, %c0_17] : memref<1x4x256xf32, #tpu.memory_space<vmem>>, vector<1x4x256xf32>
    %25 = vector.broadcast %23 : vector<1x4x1xf32> to vector<1x4x256xf32>
    %26 = arith.mulf %24, %25 : vector<1x4x256xf32>
    %c0_18 = arith.constant 0 : index
    %c0_19 = arith.constant 0 : index
    %c0_20 = arith.constant 0 : index
    %27 = vector.load %arg6[%c0_18, %c0_19, %c0_20] : memref<1x4x256xf32, #tpu.memory_space<vmem>>, vector<1x4x256xf32>
    tpu.vector_store %arg6[%c0_18, %c0_19, %c0_20], %26 {strides = array<i32>} : memref<1x4x256xf32, #tpu.memory_space<vmem>>, vector<1x4x256xf32>,
    return
  }
  func.func @transform_0(%arg0: i32) -> (i32, i32, i32) {
    %c0_i32 = arith.constant 0 : i32
    %c0_i32_0 = arith.constant 0 : i32
    %c0_i32_1 = arith.constant 0 : i32
    return %arg0, %c0_i32, %c0_i32_0 : i32, i32, i32
  }
  func.func @transform_1(%arg0: i32) -> (i32, i32) {
    %c0_i32 = arith.constant 0 : i32
    %c0_i32_0 = arith.constant 0 : i32
    %c0_i32_1 = arith.constant 0 : i32
    return %c0_i32, %c0_i32_0 : i32, i32
  }
  func.func @transform_2(%arg0: i32) -> (i32, i32) {
    %c0_i32 = arith.constant 0 : i32
    %c0_i32_0 = arith.constant 0 : i32
    %c0_i32_1 = arith.constant 0 : i32
    return %c0_i32, %c0_i32_0 : i32, i32
  }
  func.func @transform_3(%arg0: i32) -> (i32, i32) {
    %c0_i32 = arith.constant 0 : i32
    %c0_i32_0 = arith.constant 0 : i32
    %c0_i32_1 = arith.constant 0 : i32
    return %c0_i32, %c0_i32_0 : i32, i32
  }
  func.func @transform_4(%arg0: i32) -> (i32, i32) {
    %c0_i32 = arith.constant 0 : i32
    %c0_i32_0 = arith.constant 0 : i32
    %c0_i32_1 = arith.constant 0 : i32
    return %c0_i32, %c0_i32_0 : i32, i32
  }
  func.func @transform_5(%arg0: i32) -> (i32, i32, i32) {
    %c0_i32 = arith.constant 0 : i32
    %c0_i32_0 = arith.constant 0 : i32
    %c0_i32_1 = arith.constant 0 : i32
    return %arg0, %c0_i32, %c0_i32_0 : i32, i32, i32
  }
}

</mosaic_0001>

<llo_original>
// kernel: tpu_custom_call.1
$region0: #{tpu_custom_call.1}
  #allocation0 [shape = 'u32[]', space=smem, size = 0x4, offset = 0x4, fixed_abs, tag = 'smem constant byte address 0x4 - core index']
  #allocation1 [shape = 'u32[72,128]{1,0:T(1,128)}', space=vmem, size = 0x9000, scoped, tag = 'internal scratch']
  %s0 = inlined_call_operand.hbm [shape: f32[2,4,256], index: 0, kind: input, shape index: {}]
  %s1 = inlined_call_operand.vmem [shape: f32[4,2], index: 1, kind: input, shape index: {}]
  %s2 = inlined_call_operand.vmem [shape: f32[1,2], index: 2, kind: input, shape index: {}]
  %s3 = inlined_call_operand.vmem [shape: f32[2,4], index: 3, kind: input, shape index: {}]
  %s4 = inlined_call_operand.vmem [shape: f32[1,4], index: 4, kind: input, shape index: {}]
  %s5 = inlined_call_operand.hbm [shape: f32[2,4,256], index: 5, kind: output, shape index: {}]
  %s6 = sld [smem:[#allocation0]]
  $region57: #{tpu_custom_call.1} parent=0
    _
  %s8 = ssub.s32 1, %s6
  %s9 = scalar_select 0, %s8, %s6
  $region1: #{tpu_custom_call.1} parent=0
    #allocation2 [shape = 'u8[8192]{0}', space=vmem, size = 0x2000, scoped, tag = 'input window, operand 0']
    #allocation3 [shape = 's32[2]{0}', space=sflag, size = 0x8, scoped, tag = 'scoped memory for tpu_custom_call.1']
    #allocation4 [shape = 's32[2]{0}', space=sflag, size = 0x8, scoped, tag = 'scoped memory for tpu_custom_call.1']
    #allocation5 [shape = 'u8[8192]{0}', space=vmem, size = 0x2000, scoped, tag = 'output window, operand 0']
    %10 = vsyncpa [#allocation3], 0
    %s11 = scalar_lea.sflag [#allocation3], 1
    %12 = vsyncpa %s11, 0
    %13 = vsyncpa [#allocation4], 0
    %s14 = scalar_lea.sflag [#allocation4], 1
    %15 = vsyncpa %s14, 0
    loop: start=0, step=1, limit=4
    $region2: #{tpu_custom_call.1} parent=1 // loop_pre_header
      _
    $region3: #{tpu_custom_call.1} parent=1 // loop_header
      %s17 = sphi 0, %s21
      %p18 = scmp.ge.s32.totalorder %s17, 4
      %s27 = sphi 0, %s29
      %s30 = sphi 0, %s27
      %s31 = sphi 0, %s30
      %s47 = sphi 0, %s31
      %s51 = sphi 0, %s51
      %s53 = sphi 0, %s51
      %s54 = sphi 0, %s53
      %s68 = sphi 0, %s54
      %s72 = sphi 0, %s72
      %s74 = sphi 0, %s72
      %s75 = sphi 0, %s74
      %s89 = sphi 0, %s75
      %s93 = sphi 0, %s93
      %s95 = sphi 0, %s93
      %s96 = sphi 0, %s95
      %s110 = sphi 0, %s96
      %s114 = sphi 0, %s114
      %s116 = sphi 0, %s114
      %s117 = sphi 0, %s116
      %s131 = sphi 0, %s117
      %s137 = sphi 0, %s139
      %s140 = sphi 0, %s137
      %s141 = sphi 0, %s140
      %s157 = sphi 0, %s141
    $region4: #{tpu_custom_call.1} parent=1 // loop_header_branch
      %20 = sbr.rel (%p18) target = $region8
    $region5: #{tpu_custom_call.1} parent=1 // loop_body
      %s22 = ssub.s32 %s17, 1
      %s23 = ssub.s32 %s17, 2
      %s24 = sadd.s32 %s17, 1
      %s25 = ssub.s32 %s17, %s24
      %p26 = scmp.eq.s32.totalorder %s25, 0
      %s28 = sadd.s32 %s27, 1
      %s29 = scalar_select %p26, %s27, %s28
      %p32 = pneg %p26
      %p33 = scmp.eq.s32.totalorder %s17, 1
      %p34 = por %p32, %p33
      %p35 = scmp.ne.s32.totalorder %s27, %s30
      %p36 = scmp.eq.s32.totalorder %s17, 0
      %p37 = por %p35, %p36
      %p38 = scmp.ne.s32.totalorder %s27, %s30
      %p39 = scmp.eq.s32.totalorder %s22, 1
      %p40 = por %p38, %p39
      %p41 = scmp.ne.s32.totalorder %s30, %s31
      %p42 = scmp.eq.s32.totalorder %s22, 0
      %p43 = por %p41, %p42
      %p44 = scmp.ne.s32.totalorder %s30, %s31
      %p45 = scmp.eq.s32.totalorder %s23, 1
      %p46 = por %p44, %p45
      %p48 = scmp.ne.s32.totalorder %s31, %s47
      %p49 = scmp.eq.s32.totalorder %s23, 0
      %p50 = por %p48, %p49
      %s52 = sadd.s32 %s51, 1
      %p55 = scmp.eq.s32.totalorder %s17, 1
      %p56 = scmp.ne.s32.totalorder %s51, %s53
      %p57 = scmp.eq.s32.totalorder %s17, 0
      %p58 = por %p56, %p57
      %p59 = scmp.ne.s32.totalorder %s51, %s53
      %p60 = scmp.eq.s32.totalorder %s22, 1
      %p61 = por %p59, %p60
      %p62 = scmp.ne.s32.totalorder %s53, %s54
      %p63 = scmp.eq.s32.totalorder %s22, 0
      %p64 = por %p62, %p63
      %p65 = scmp.ne.s32.totalorder %s53, %s54
      %p66 = scmp.eq.s32.totalorder %s23, 1
      %p67 = por %p65, %p66
      %p69 = scmp.ne.s32.totalorder %s54, %s68
      %p70 = scmp.eq.s32.totalorder %s23, 0
      %p71 = por %p69, %p70
      %s73 = sadd.s32 %s72, 1
      %p76 = scmp.eq.s32.totalorder %s17, 1
      %p77 = scmp.ne.s32.totalorder %s72, %s74
      %p78 = scmp.eq.s32.totalorder %s17, 0
      %p79 = por %p77, %p78
      %p80 = scmp.ne.s32.totalorder %s72, %s74
      %p81 = scmp.eq.s32.totalorder %s22, 1
      %p82 = por %p80, %p81
      %p83 = scmp.ne.s32.totalorder %s74, %s75
      %p84 = scmp.eq.s32.totalorder %s22, 0
      %p85 = por %p83, %p84
      %p86 = scmp.ne.s32.totalorder %s74, %s75
      %p87 = scmp.eq.s32.totalorder %s23, 1
      %p88 = por %p86, %p87
      %p90 = scmp.ne.s32.totalorder %s75, %s89
      %p91 = scmp.eq.s32.totalorder %s23, 0
      %p92 = por %p90, %p91
      %s94 = sadd.s32 %s93, 1
      %p97 = scmp.eq.s32.totalorder %s17, 1
      %p98 = scmp.ne.s32.totalorder %s93, %s95
      %p99 = scmp.eq.s32.totalorder %s17, 0
      %p100 = por %p98, %p99
      %p101 = scmp.ne.s32.totalorder %s93, %s95
      %p102 = scmp.eq.s32.totalorder %s22, 1
      %p103 = por %p101, %p102
      %p104 = scmp.ne.s32.totalorder %s95, %s96
      %p105 = scmp.eq.s32.totalorder %s22, 0
      %p106 = por %p104, %p105
      %p107 = scmp.ne.s32.totalorder %s95, %s96
      %p108 = scmp.eq.s32.totalorder %s23, 1
      %p109 = por %p107, %p108
      %p111 = scmp.ne.s32.totalorder %s96, %s110
      %p112 = scmp.eq.s32.totalorder %s23, 0
      %p113 = por %p111, %p112
      %s115 = sadd.s32 %s114, 1
      %p118 = scmp.eq.s32.totalorder %s17, 1
      %p119 = scmp.ne.s32.totalorder %s114, %s116
      %p120 = scmp.eq.s32.totalorder %s17, 0
      %p121 = por %p119, %p120
      %p122 = scmp.ne.s32.totalorder %s114, %s116
      %p123 = scmp.eq.s32.totalorder %s22, 1
      %p124 = por %p122, %p123
      %p125 = scmp.ne.s32.totalorder %s116, %s117
      %p126 = scmp.eq.s32.totalorder %s22, 0
      %p127 = por %p125, %p126
      %p128 = scmp.ne.s32.totalorder %s116, %s117
      %p129 = scmp.eq.s32.totalorder %s23, 1
      %p130 = por %p128, %p129
      %p132 = scmp.ne.s32.totalorder %s117, %s131
      %p133 = scmp.eq.s32.totalorder %s23, 0
      %p134 = por %p132, %p133
      %s135 = ssub.s32 %s17, %s24
      %p136 = scmp.eq.s32.totalorder %s135, 0
      %s138 = sadd.s32 %s137, 1
      %s139 = scalar_select %p136, %s137, %s138
      %p142 = pneg %p136
      %p143 = scmp.eq.s32.totalorder %s17, 1
      %p144 = por %p142, %p143
      %p145 = scmp.ne.s32.totalorder %s137, %s140
      %p146 = scmp.eq.s32.totalorder %s17, 0
      %p147 = por %p145, %p146
      %p148 = scmp.ne.s32.totalorder %s137, %s140
      %p149 = scmp.eq.s32.totalorder %s22, 1
      %p150 = por %p148, %p149
      %p151 = scmp.ne.s32.totalorder %s140, %s141
      %p152 = scmp.eq.s32.totalorder %s22, 0
      %p153 = por %p151, %p152
      %p154 = scmp.ne.s32.totalorder %s140, %s141
      %p155 = scmp.eq.s32.totalorder %s23, 1
      %p156 = por %p154, %p155
      %p158 = scmp.ne.s32.totalorder %s141, %s157
      %p159 = scmp.eq.s32.totalorder %s23, 0
      %p160 = por %p158, %p159
      %p161 = scmp.le.s32.totalorder 1, %s17
      %p162 = scmp.lt.s32.totalorder %s17, 3
      %p163 = pnand %p161, %p162
      %p164 = pneg %p163
      // Predicated region
      $region9: #{tpu_custom_call.1} parent=5 // pred_check
        _
      $region10: #{tpu_custom_call.1} parent=5 // pred_check_branch
        %166 = sbr.rel (%p163) target = $region12
      $region11: #{tpu_custom_call.1} parent=5 // pred_region
        %s167 = ssub.s32 %s17, 1
        // Predicated region
        $region13: #{tpu_custom_call.1} parent=11 // pred_check
          %p168 = pneg %p64
        $region14: #{tpu_custom_call.1} parent=11 // pred_check_branch
          %170 = sbr.rel (%p168) target = $region16
        $region15: #{tpu_custom_call.1} parent=11 // pred_region
          _
        $region16: #{tpu_custom_call.1} parent=11 // pred_fallthru
          _
        // Predicated region
        $region17: #{tpu_custom_call.1} parent=11 // pred_check
          %p171 = pneg %p85
        $region18: #{tpu_custom_call.1} parent=11 // pred_check_branch
          %173 = sbr.rel (%p171) target = $region20
        $region19: #{tpu_custom_call.1} parent=11 // pred_region
          _
        $region20: #{tpu_custom_call.1} parent=11 // pred_fallthru
          _
        // Predicated region
        $region21: #{tpu_custom_call.1} parent=11 // pred_check
          %p174 = pneg %p106
        $region22: #{tpu_custom_call.1} parent=11 // pred_check_branch
          %176 = sbr.rel (%p174) target = $region24
        $region23: #{tpu_custom_call.1} parent=11 // pred_region
          _
        $region24: #{tpu_custom_call.1} parent=11 // pred_fallthru
          _
        // Predicated region
        $region25: #{tpu_custom_call.1} parent=11 // pred_check
          %p177 = pneg %p127
        $region26: #{tpu_custom_call.1} parent=11 // pred_check_branch
          %179 = sbr.rel (%p177) target = $region28
        $region27: #{tpu_custom_call.1} parent=11 // pred_region
          _
        $region28: #{tpu_custom_call.1} parent=11 // pred_fallthru
          _
      $region12: #{tpu_custom_call.1} parent=5 // pred_fallthru
        _
      %p180 = scmp.lt.s32.totalorder %s17, 2
      // Predicated region
      $region29: #{tpu_custom_call.1} parent=5 // pred_check
        %p181 = pneg %p180
      $region30: #{tpu_custom_call.1} parent=5 // pred_check_branch
        %183 = sbr.rel (%p181) target = $region32
      $region31: #{tpu_custom_call.1} parent=5 // pred_region
        // Predicated region
        $region33: #{tpu_custom_call.1} parent=31 // pred_check
          %p184 = pneg %p37
        $region34: #{tpu_custom_call.1} parent=31 // pred_check_branch
          %186 = sbr.rel (%p184) target = $region36
        $region35: #{tpu_custom_call.1} parent=31 // pred_region
          %s187 = sand.u32 %s27, 1
          %s188 = scalar_lea.sflag [#allocation3], %s187
          %s189 = sand.u32 %s27, 1
          %s190 = smul.addr %s189, 8
          %s191 = scalar_lea.vmem [#allocation2], %s190
          %193 = vsyncadd %s188, 0
          %s194 = smul.addr %s17, 2
          %s195 = smul.addr %s194, 4
          %s196 = scalar_lea.hbm %s0, %s195
          %s198 = sshll.u32 %s196, 4
          %s199 = int_to_ptr.hbm [resolvable:$true] %s198
          %s200 = sshll.u32 %s191, 4
          %s201 = int_to_ptr.vmem [resolvable:$true] %s200
          %203 = dma.hbm_to_vmem [thread:$0]  %s199, 128, %s201, %s188
        $region36: #{tpu_custom_call.1} parent=31 // pred_fallthru
          _
      $region32: #{tpu_custom_call.1} parent=5 // pred_fallthru
        _
      %p204 = scmp.le.s32.totalorder 1, %s17
      %p205 = scmp.lt.s32.totalorder %s17, 3
      %p206 = pnand %p204, %p205
      %p207 = pneg %p206
      // Predicated region
      $region37: #{tpu_custom_call.1} parent=5 // pred_check
        _
      $region38: #{tpu_custom_call.1} parent=5 // pred_check_branch
        %209 = sbr.rel (%p206) target = $region40
      $region39: #{tpu_custom_call.1} parent=5 // pred_region
        %s210 = ssub.s32 %s17, 1
        %s211 = sand.u32 %s30, 1
        %s212 = scalar_lea.sflag [#allocation3], %s211
        %s213 = sand.u32 %s30, 1
        %s214 = smul.addr %s213, 8
        %s215 = scalar_lea.vmem [#allocation2], %s214
        // Predicated region
        $region41: #{tpu_custom_call.1} parent=39 // pred_check
          %p216 = pneg %p43
        $region42: #{tpu_custom_call.1} parent=39 // pred_check_branch
          %218 = sbr.rel (%p216) target = $region44
        $region43: #{tpu_custom_call.1} parent=39 // pred_region
          %220 = dma.done %s212, 128
        $region44: #{tpu_custom_call.1} parent=39 // pred_fallthru
          _
        %s221 = sand.u32 %s30, 1
        %s222 = scalar_lea.sflag [#allocation3], %s221
        %s223 = sand.u32 %s30, 1
        %s224 = smul.addr %s223, 8
        %s225 = scalar_lea.vmem [#allocation2], %s224
        %p226 = pneg %p43
        %p227 = pneg %p40
        %p228 = pneg %p64
        %p229 = pneg %p61
        %p230 = pneg %p85
        %p231 = pneg %p82
        %p232 = pneg %p106
        %p233 = pneg %p103
        %p234 = pneg %p127
        %p235 = pneg %p124
        %p236 = pneg %p153
        %p237 = pneg %p150
        %s238 = sand.u32 %s140, 1
        %s239 = scalar_lea.sflag [#allocation4], %s238
        %s240 = sand.u32 %s140, 1
        %s241 = smul.addr %s240, 8
        %s242 = scalar_lea.vmem [#allocation5], %s241
        %v243 = vld [vmem:[%s215] sm:$0xff]
        %245 = vst [vmem:[#allocation1] ss:$2 sm:$0xff] %v243
        %v246 = vld.sshfl [vmem:[#allocation1] sm:$0xff pattern:$0x75316420]
        %v247 = vld.sshfl [vmem:[#allocation1 + $0x8] sm:$0xff pattern:$0x75316420]
        %vm250 = vcmask 1043456
        %v251 = vsel %vm250, %v246, 0.0
        %v252 = vsel %vm250, %v247, 0.0
        %v253 = vadd.f32 %v251, %v252
        %254 = vadd.xlane.f32.xlu0 %v253
        %v255 = vpop.xlane.xlu0 %254
        %v256 = vrcp.pop 256.0
        %v257 = vmul.f32 256.0, %v256
        %v258 = vsub.f32 1.0, %v257
        %v259 = vmul.f32 %v256, %v258
        %v260 = vadd.f32 %v256, %v259
        %vm261 = vweird.f32 %v256
        %v262 = vsel %vm261, %v256, %v260
        %v263 = vmul.f32 %v255, %v262
        %v264 = vld [vmem:[%s1] sm:$0xf]
        %v265 = vld [vmem:[%s2] sm:$0x1]
        %v267 = vlaneseq
        %v268 = vand.u32 %v267, 127
        %v269 = vperm.slane %v263, %v268
        %vm270 = vcmask 31744
        %v271 = vsel %vm270, %v269, 0
        %v274 = vsel %vm250, %v264, 0
        %276 = vmatpush.msra.mxu0 0.0
        %277 = vmatpush.msra.mxu0 0.0
        %278 = vmatpush.msra.mxu0 0.0
        %279 = vmatpush.msra.mxu0 0.0
        %280 = vmatpush.msra.mxu0 0.0
        %281 = vmatpush.msra.mxu0 0.0
        %282 = vmatpush.msra.mxu0 0.0
        %283 = vmatpush.msra.mxu0 0.0
        %284 = vmatpush.msra.mxu0 0.0
        %285 = vmatpush.msra.mxu0 0.0
        %286 = vmatpush.msra.mxu0 0.0
        %287 = vmatpush.msra.mxu0 0.0
        %288 = vmatpush.msra.mxu0 0.0
        %289 = vmatpush.msra.mxu0 0.0
        %290 = vmatpush.msra.mxu0 0.0
        %v291 = vand.u32 %v274, 4294901760
        %292 = vmatpush.msra.mxu0 %v291
        %v293 = vand.u32 %v271, 4294901760
        %v294 = vsub.f32 %v271, %v293
        %v295 = vand.u32 %v294, 4294901760
        %v296 = vsub.f32 %v294, %v295
        %v297 = vand.u32 %v296, 4294901760
        %298 = vmatmul.f32.gmra.mxu0 %v297
        %v299 = vpop.f32.mrf.mxu0
        %v300 = vadd.f32 %v265, %v299
        %301 = vdwg.mxu0
        %302 = vmatpush.msra.mxu0 0.0
        %303 = vmatpush.msra.mxu0 0.0
        %304 = vmatpush.msra.mxu0 0.0
        %305 = vmatpush.msra.mxu0 0.0
        %306 = vmatpush.msra.mxu0 0.0
        %307 = vmatpush.msra.mxu0 0.0
        %308 = vmatpush.msra.mxu0 0.0
        %309 = vmatpush.msra.mxu0 0.0
        %310 = vmatpush.msra.mxu0 0.0
        %311 = vmatpush.msra.mxu0 0.0
        %312 = vmatpush.msra.mxu0 0.0
        %313 = vmatpush.msra.mxu0 0.0
        %314 = vmatpush.msra.mxu0 0.0
        %315 = vmatpush.msra.mxu0 0.0
        %316 = vmatpush.msra.mxu0 0.0
        %v317 = vand.u32 %v274, 4294901760
        %v318 = vsub.f32 %v274, %v317
        %v319 = vand.u32 %v318, 4294901760
        %v320 = vsub.f32 %v318, %v319
        %v321 = vand.u32 %v320, 4294901760
        %322 = vmatpush.msra.mxu0 %v321
        %v323 = vand.u32 %v271, 4294901760
        %324 = vmatmul.f32.gmra.mxu0 %v323
        %v325 = vpop.f32.mrf.mxu0
        %v326 = vadd.f32 %v300, %v325
        %327 = vdwg.mxu0
        %328 = vmatpush.msra.mxu0 0.0
        %329 = vmatpush.msra.mxu0 0.0
        %330 = vmatpush.msra.mxu0 0.0
        %331 = vmatpush.msra.mxu0 0.0
        %332 = vmatpush.msra.mxu0 0.0
        %333 = vmatpush.msra.mxu0 0.0
        %334 = vmatpush.msra.mxu0 0.0
        %335 = vmatpush.msra.mxu0 0.0
        %336 = vmatpush.msra.mxu0 0.0
        %337 = vmatpush.msra.mxu0 0.0
        %338 = vmatpush.msra.mxu0 0.0
        %339 = vmatpush.msra.mxu0 0.0
        %340 = vmatpush.msra.mxu0 0.0
        %341 = vmatpush.msra.mxu0 0.0
        %342 = vmatpush.msra.mxu0 0.0
        %v343 = vand.u32 %v274, 4294901760
        %v344 = vsub.f32 %v274, %v343
        %345 = vmatpush.msra.mxu0 %v344
        %v346 = vand.u32 %v271, 4294901760
        %v347 = vsub.f32 %v271, %v346
        %348 = vmatmul.f32.gmra.mxu0 %v347
        %v349 = vpop.f32.mrf.mxu0
        %v350 = vadd.f32 %v326, %v349
        %351 = vdwg.mxu0
        %352 = vmatpush.msra.mxu0 0.0
        %353 = vmatpush.msra.mxu0 0.0
        %354 = vmatpush.msra.mxu0 0.0
        %355 = vmatpush.msra.mxu0 0.0
        %356 = vmatpush.msra.mxu0 0.0
        %357 = vmatpush.msra.mxu0 0.0
        %358 = vmatpush.msra.mxu0 0.0
        %359 = vmatpush.msra.mxu0 0.0
        %360 = vmatpush.msra.mxu0 0.0
        %361 = vmatpush.msra.mxu0 0.0
        %362 = vmatpush.msra.mxu0 0.0
        %363 = vmatpush.msra.mxu0 0.0
        %364 = vmatpush.msra.mxu0 0.0
        %365 = vmatpush.msra.mxu0 0.0
        %366 = vmatpush.msra.mxu0 0.0
        %v367 = vand.u32 %v274, 4294901760
        %368 = vmatpush.msra.mxu0 %v367
        %v369 = vand.u32 %v271, 4294901760
        %v370 = vsub.f32 %v271, %v369
        %v371 = vand.u32 %v370, 4294901760
        %372 = vmatmul.f32.gmra.mxu0 %v371
        %v373 = vpop.f32.mrf.mxu0
        %v374 = vadd.f32 %v350, %v373
        %375 = vdwg.mxu0
        %376 = vmatpush.msra.mxu0 0.0
        %377 = vmatpush.msra.mxu0 0.0
        %378 = vmatpush.msra.mxu0 0.0
        %379 = vmatpush.msra.mxu0 0.0
        %380 = vmatpush.msra.mxu0 0.0
        %381 = vmatpush.msra.mxu0 0.0
        %382 = vmatpush.msra.mxu0 0.0
        %383 = vmatpush.msra.mxu0 0.0
        %384 = vmatpush.msra.mxu0 0.0
        %385 = vmatpush.msra.mxu0 0.0
        %386 = vmatpush.msra.mxu0 0.0
        %387 = vmatpush.msra.mxu0 0.0
        %388 = vmatpush.msra.mxu0 0.0
        %389 = vmatpush.msra.mxu0 0.0
        %390 = vmatpush.msra.mxu0 0.0
        %v391 = vand.u32 %v274, 4294901760
        %v392 = vsub.f32 %v274, %v391
        %v393 = vand.u32 %v392, 4294901760
        %394 = vmatpush.msra.mxu0 %v393
        %v395 = vand.u32 %v271, 4294901760
        %396 = vmatmul.f32.gmra.mxu0 %v395
        %v397 = vpop.f32.mrf.mxu0
        %v398 = vadd.f32 %v374, %v397
        %399 = vdwg.mxu0
        %400 = vmatpush.msra.mxu0 0.0
        %401 = vmatpush.msra.mxu0 0.0
        %402 = vmatpush.msra.mxu0 0.0
        %403 = vmatpush.msra.mxu0 0.0
        %404 = vmatpush.msra.mxu0 0.0
        %405 = vmatpush.msra.mxu0 0.0
        %406 = vmatpush.msra.mxu0 0.0
        %407 = vmatpush.msra.mxu0 0.0
        %408 = vmatpush.msra.mxu0 0.0
        %409 = vmatpush.msra.mxu0 0.0
        %410 = vmatpush.msra.mxu0 0.0
        %411 = vmatpush.msra.mxu0 0.0
        %412 = vmatpush.msra.mxu0 0.0
        %413 = vmatpush.msra.mxu0 0.0
        %414 = vmatpush.msra.mxu0 0.0
        %v415 = vand.u32 %v274, 4294901760
        %416 = vmatpush.msra.mxu0 %v415
        %v417 = vand.u32 %v271, 4294901760
        %418 = vmatmul.f32.gmra.mxu0 %v417
        %v419 = vpop.f32.mrf.mxu0
        %v420 = vadd.f32 %v398, %v419
        %421 = vdwg.mxu0
        %v422 = vxor.u32 %v420, 2147483648
        %v423 = vmul.f32 %v422, 1.442695
        %v424 = vpow.pop %v423
        %v425 = vadd.f32 %v424, 1.0
        %v426 = vrcp.pop %v425
        %v427 = vmul.f32 %v425, %v426
        %v428 = vsub.f32 1.0, %v427
        %v429 = vmul.f32 %v426, %v428
        %v430 = vadd.f32 %v426, %v429
        %vm431 = vweird.f32 %v425
        %vm432 = vweird.f32 %v426
        %vm433 = vmor %vm431, %vm432
        %v434 = vsel %vm433, %v426, %v430
        %v435 = vand.u32 2147483647, %v425
        %vm436 = vcmp.eq.f32.partialorder %v435, 8.507059e+37
        %v437 = vand.u32 %v425, 2147483648
        %v438 = vor.u32 1.1754944e-38, %v437
        %v439 = vsel %vm436, %v438, %v434
        %v440 = vmul.f32 1.0, %v439
        %v441 = vmul.f32 %v420, %v440
        %v442 = vld [vmem:[%s3] sm:$0x3]
        %v443 = vld [vmem:[%s4] sm:$0x1]
        %vm444 = vcmask 15360
        %v446 = vsel %vm444, %v441, 0
        %vm448 = vcmask 1041408
        %v450 = vsel %vm448, %v442, 0
        %452 = vmatpush.msra.mxu0 0.0
        %453 = vmatpush.msra.mxu0 0.0
        %454 = vmatpush.msra.mxu0 0.0
        %455 = vmatpush.msra.mxu0 0.0
        %456 = vmatpush.msra.mxu0 0.0
        %457 = vmatpush.msra.mxu0 0.0
        %458 = vmatpush.msra.mxu0 0.0
        %459 = vmatpush.msra.mxu0 0.0
        %460 = vmatpush.msra.mxu0 0.0
        %461 = vmatpush.msra.mxu0 0.0
        %462 = vmatpush.msra.mxu0 0.0
        %463 = vmatpush.msra.mxu0 0.0
        %464 = vmatpush.msra.mxu0 0.0
        %465 = vmatpush.msra.mxu0 0.0
        %466 = vmatpush.msra.mxu0 0.0
        %v467 = vand.u32 %v450, 4294901760
        %468 = vmatpush.msra.mxu0 %v467
        %v469 = vand.u32 %v446, 4294901760
        %v470 = vsub.f32 %v446, %v469
        %v471 = vand.u32 %v470, 4294901760
        %v472 = vsub.f32 %v470, %v471
        %v473 = vand.u32 %v472, 4294901760
        %474 = vmatmul.f32.gmra.mxu0 %v473
        %v475 = vpop.f32.mrf.mxu0
        %v476 = vadd.f32 %v443, %v475
        %477 = vdwg.mxu0
        %478 = vmatpush.msra.mxu0 0.0
        %479 = vmatpush.msra.mxu0 0.0
        %480 = vmatpush.msra.mxu0 0.0
        %481 = vmatpush.msra.mxu0 0.0
        %482 = vmatpush.msra.mxu0 0.0
        %483 = vmatpush.msra.mxu0 0.0
        %484 = vmatpush.msra.mxu0 0.0
        %485 = vmatpush.msra.mxu0 0.0
        %486 = vmatpush.msra.mxu0 0.0
        %487 = vmatpush.msra.mxu0 0.0
        %488 = vmatpush.msra.mxu0 0.0
        %489 = vmatpush.msra.mxu0 0.0
        %490 = vmatpush.msra.mxu0 0.0
        %491 = vmatpush.msra.mxu0 0.0
        %492 = vmatpush.msra.mxu0 0.0
        %v493 = vand.u32 %v450, 4294901760
        %v494 = vsub.f32 %v450, %v493
        %v495 = vand.u32 %v494, 4294901760
        %v496 = vsub.f32 %v494, %v495
        %v497 = vand.u32 %v496, 4294901760
        %498 = vmatpush.msra.mxu0 %v497
        %v499 = vand.u32 %v446, 4294901760
        %500 = vmatmul.f32.gmra.mxu0 %v499
        %v501 = vpop.f32.mrf.mxu0
        %v502 = vadd.f32 %v476, %v501
        %503 = vdwg.mxu0
        %504 = vmatpush.msra.mxu0 0.0
        %505 = vmatpush.msra.mxu0 0.0
        %506 = vmatpush.msra.mxu0 0.0
        %507 = vmatpush.msra.mxu0 0.0
        %508 = vmatpush.msra.mxu0 0.0
        %509 = vmatpush.msra.mxu0 0.0
        %510 = vmatpush.msra.mxu0 0.0
        %511 = vmatpush.msra.mxu0 0.0
        %512 = vmatpush.msra.mxu0 0.0
        %513 = vmatpush.msra.mxu0 0.0
        %514 = vmatpush.msra.mxu0 0.0
        %515 = vmatpush.msra.mxu0 0.0
        %516 = vmatpush.msra.mxu0 0.0
        %517 = vmatpush.msra.mxu0 0.0
        %518 = vmatpush.msra.mxu0 0.0
        %v519 = vand.u32 %v450, 4294901760
        %v520 = vsub.f32 %v450, %v519
        %521 = vmatpush.msra.mxu0 %v520
        %v522 = vand.u32 %v446, 4294901760
        %v523 = vsub.f32 %v446, %v522
        %524 = vmatmul.f32.gmra.mxu0 %v523
        %v525 = vpop.f32.mrf.mxu0
        %v526 = vadd.f32 %v502, %v525
        %527 = vdwg.mxu0
        %528 = vmatpush.msra.mxu0 0.0
        %529 = vmatpush.msra.mxu0 0.0
        %530 = vmatpush.msra.mxu0 0.0
        %531 = vmatpush.msra.mxu0 0.0
        %532 = vmatpush.msra.mxu0 0.0
        %533 = vmatpush.msra.mxu0 0.0
        %534 = vmatpush.msra.mxu0 0.0
        %535 = vmatpush.msra.mxu0 0.0
        %536 = vmatpush.msra.mxu0 0.0
        %537 = vmatpush.msra.mxu0 0.0
        %538 = vmatpush.msra.mxu0 0.0
        %539 = vmatpush.msra.mxu0 0.0
        %540 = vmatpush.msra.mxu0 0.0
        %541 = vmatpush.msra.mxu0 0.0
        %542 = vmatpush.msra.mxu0 0.0
        %v543 = vand.u32 %v450, 4294901760
        %544 = vmatpush.msra.mxu0 %v543
        %v545 = vand.u32 %v446, 4294901760
        %v546 = vsub.f32 %v446, %v545
        %v547 = vand.u32 %v546, 4294901760
        %548 = vmatmul.f32.gmra.mxu0 %v547
        %v549 = vpop.f32.mrf.mxu0
        %v550 = vadd.f32 %v526, %v549
        %551 = vdwg.mxu0
        %552 = vmatpush.msra.mxu0 0.0
        %553 = vmatpush.msra.mxu0 0.0
        %554 = vmatpush.msra.mxu0 0.0
        %555 = vmatpush.msra.mxu0 0.0
        %556 = vmatpush.msra.mxu0 0.0
        %557 = vmatpush.msra.mxu0 0.0
        %558 = vmatpush.msra.mxu0 0.0
        %559 = vmatpush.msra.mxu0 0.0
        %560 = vmatpush.msra.mxu0 0.0
        %561 = vmatpush.msra.mxu0 0.0
        %562 = vmatpush.msra.mxu0 0.0
        %563 = vmatpush.msra.mxu0 0.0
        %564 = vmatpush.msra.mxu0 0.0
        %565 = vmatpush.msra.mxu0 0.0
        %566 = vmatpush.msra.mxu0 0.0
        %v567 = vand.u32 %v450, 4294901760
        %v568 = vsub.f32 %v450, %v567
        %v569 = vand.u32 %v568, 4294901760
        %570 = vmatpush.msra.mxu0 %v569
        %v571 = vand.u32 %v446, 4294901760
        %572 = vmatmul.f32.gmra.mxu0 %v571
        %v573 = vpop.f32.mrf.mxu0
        %v574 = vadd.f32 %v550, %v573
        %575 = vdwg.mxu0
        %576 = vmatpush.msra.mxu0 0.0
        %577 = vmatpush.msra.mxu0 0.0
        %578 = vmatpush.msra.mxu0 0.0
        %579 = vmatpush.msra.mxu0 0.0
        %580 = vmatpush.msra.mxu0 0.0
        %581 = vmatpush.msra.mxu0 0.0
        %582 = vmatpush.msra.mxu0 0.0
        %583 = vmatpush.msra.mxu0 0.0
        %584 = vmatpush.msra.mxu0 0.0
        %585 = vmatpush.msra.mxu0 0.0
        %586 = vmatpush.msra.mxu0 0.0
        %587 = vmatpush.msra.mxu0 0.0
        %588 = vmatpush.msra.mxu0 0.0
        %589 = vmatpush.msra.mxu0 0.0
        %590 = vmatpush.msra.mxu0 0.0
        %v591 = vand.u32 %v450, 4294901760
        %592 = vmatpush.msra.mxu0 %v591
        %v593 = vand.u32 %v446, 4294901760
        %594 = vmatmul.f32.gmra.mxu0 %v593
        %v595 = vpop.f32.mrf.mxu0
        %v596 = vadd.f32 %v574, %v595
        %597 = vdwg.mxu0
        %v598 = vxor.u32 %v596, 2147483648
        %v599 = vmul.f32 %v598, 1.442695
        %v600 = vpow.pop %v599
        %v601 = vadd.f32 %v600, 1.0
        %v602 = vrcp.pop %v601
        %v603 = vmul.f32 %v601, %v602
        %v604 = vsub.f32 1.0, %v603
        %v605 = vmul.f32 %v602, %v604
        %v606 = vadd.f32 %v602, %v605
        %vm607 = vweird.f32 %v601
        %vm608 = vweird.f32 %v602
        %vm609 = vmor %vm607, %vm608
        %v610 = vsel %vm609, %v602, %v606
        %v611 = vand.u32 2147483647, %v601
        %vm612 = vcmp.eq.f32.partialorder %v611, 8.507059e+37
        %v613 = vand.u32 %v601, 2147483648
        %v614 = vor.u32 1.1754944e-38, %v613
        %v615 = vsel %vm612, %v614, %v610
        %v616 = vmul.f32 1.0, %v615
        %v617 = vperm.slane %v616, 0
        %v618 = vlaneseq
        %v619 = vshrl.u32 %v618, 7
        %621 = vset.pattern.permute.xlu0 %v619
        %622 = vperm.xlu0 %621, %v617
        %v623 = vpop.permute.xlu0 %622
        %v626 = vunpack.c.l.s4 839922192
        %v627 = vunpack.c.0.s8 %v626
        %v628 = vperm.slane %v623, %v627
        %v630 = vmul.f32 %v243, %v628
        %631 = vst [vmem:[%s242] sm:$0xff] %v630
        %s632 = sand.u32 %s140, 1
        %s633 = scalar_lea.sflag [#allocation4], %s632
        %s634 = sand.u32 %s140, 1
        %s635 = smul.addr %s634, 8
        %s636 = scalar_lea.vmem [#allocation5], %s635
        // Predicated region
        $region45: #{tpu_custom_call.1} parent=39 // pred_check
          %p637 = pneg %p150
        $region46: #{tpu_custom_call.1} parent=39 // pred_check_branch
          %639 = sbr.rel (%p637) target = $region48
        $region47: #{tpu_custom_call.1} parent=39 // pred_region
          %641 = vsyncadd %s633, 0
          %s642 = smul.addr %s22, 2
          %s643 = smul.addr %s642, 4
          %s644 = scalar_lea.hbm %s5, %s643
          %s646 = sshll.u32 %s636, 4
          %s647 = int_to_ptr.vmem [resolvable:$true] %s646
          %s648 = sshll.u32 %s644, 4
          %s649 = int_to_ptr.hbm [resolvable:$true] %s648
          %651 = dma.vmem_to_hbm [thread:$0]  %s647, 128, %s649, %s633
        $region48: #{tpu_custom_call.1} parent=39 // pred_fallthru
          _
      $region40: #{tpu_custom_call.1} parent=5 // pred_fallthru
        _
      %p652 = scmp.le.s32.totalorder 2, %s17
      // Predicated region
      $region49: #{tpu_custom_call.1} parent=5 // pred_check
        %p653 = pneg %p652
      $region50: #{tpu_custom_call.1} parent=5 // pred_check_branch
        %655 = sbr.rel (%p653) target = $region52
      $region51: #{tpu_custom_call.1} parent=5 // pred_region
        %s656 = ssub.s32 %s17, 2
        // Predicated region
        $region53: #{tpu_custom_call.1} parent=51 // pred_check
          %p657 = pneg %p156
        $region54: #{tpu_custom_call.1} parent=51 // pred_check_branch
          %659 = sbr.rel (%p657) target = $region56
        $region55: #{tpu_custom_call.1} parent=51 // pred_region
          %s660 = sand.u32 %s141, 1
          %s661 = scalar_lea.sflag [#allocation4], %s660
          %s662 = sand.u32 %s141, 1
          %s663 = smul.addr %s662, 8
          %s664 = scalar_lea.vmem [#allocation5], %s663
          %666 = dma.done %s661, 128
        $region56: #{tpu_custom_call.1} parent=51 // pred_fallthru
          _
      $region52: #{tpu_custom_call.1} parent=5 // pred_fallthru
        _
    $region6: #{tpu_custom_call.1} parent=1 // loop_footer
      %s21 = sadd.s32 1, %s17
    $region7: #{tpu_custom_call.1} parent=1 // loop_footer_branch
      %16 = sbr.rel target = $region3
    $region8: #{tpu_custom_call.1} parent=1 // loop_exit
      _
    %667 = vsyncpa [#allocation3], 1
    %s668 = scalar_lea.sflag [#allocation3], 1
    %669 = vsyncpa %s668, 1
    %670 = vsyncpa [#allocation4], 1
    %s671 = scalar_lea.sflag [#allocation4], 1
    %672 = vsyncpa %s671, 1

</llo_original>
